<compile_context>
chip_gen: v7x
topology: tpu7x:2x2x1
jax: 0.10.0
libtpu: 0.0.40
codegen_flags: <defaults>
</compile_context>

<pallas_src>
import functools
import math

import jax
import jax.numpy as jnp
from jax.experimental import pallas as pl
from jax.experimental.pallas import tpu as pltpu


# ----------------------------- helpers -----------------------------

def _pick_tile(dim, pref):
    """Use the preferred (MXU/lane aligned) tile if it divides the dim, else full extent."""
    return pref if (dim >= pref and dim % pref == 0) else dim


# ----------------------------- Pallas kernels -----------------------------

def _linear_kernel(x_ref, w_ref, b_ref, o_ref, acc_ref, *, activation):
    """One (tm, tn) output tile; K is reduced over grid axis 2 into a VMEM f32 accumulator."""
    k = pl.program_id(2)

    @pl.when(k == 0)
    def _():
        acc_ref[...] = jnp.zeros_like(acc_ref)

    # bf16 MXU matmul, f32 accumulation.
    acc_ref[...] += jnp.dot(
        x_ref[...].astype(jnp.bfloat16),
        w_ref[...],  # weights stored bf16
        preferred_element_type=jnp.float32,
    )

    @pl.when(k == pl.num_programs(2) - 1)
    def _():
        y = acc_ref[...] + b_ref[...]
        if activation == "gelu":
            # TODO(synk): HF DistilBERT uses exact erf-GELU; tanh approximation kept
            # here for robust TPU lowering (small numerical divergence).
            y = jax.nn.gelu(y, approximate=True)
        o_ref[...] = y


def linear(x, w, b, activation=None, tm=256, tn=256, tk=512):
    """x: (M, K) f32, w: (K, N) bf16, b: (1, N) f32 -> (M, N) f32. Tiled/pipelined MXU matmul."""
    M, K = x.shape
    N = w.shape[1]
    tm = _pick_tile(M, tm)
    tn = _pick_tile(N, tn)
    tk = _pick_tile(K, tk)
    grid = (M // tm, N // tn, K // tk)
    return pl.pallas_call(
        functools.partial(_linear_kernel, activation=activation),
        out_shape=jax.ShapeDtypeStruct((M, N), jnp.float32),
        grid=grid,
        in_specs=[
            pl.BlockSpec((tm, tk), lambda i, j, k: (i, k)),
            pl.BlockSpec((tk, tn), lambda i, j, k: (k, j)),
            pl.BlockSpec((1, tn), lambda i, j, k: (0, j)),
        ],
        out_specs=pl.BlockSpec((tm, tn), lambda i, j, k: (i, j)),
        scratch_shapes=[pltpu.VMEM((tm, tn), jnp.float32)],
        compiler_params=pltpu.CompilerParams(
            dimension_semantics=("parallel", "parallel", "arbitrary"),
        ),
    )(x, w, b)


def _add_layernorm_kernel(x_ref, r_ref, g_ref, b_ref, o_ref, *, eps):
    """Fused residual add + LayerNorm on a (tm, H) row tile (all math in f32)."""
    x = x_ref[...] + r_ref[...]
    mean = jnp.mean(x, axis=-1, keepdims=True)
    var = jnp.mean((x - mean) ** 2, axis=-1, keepdims=True)
    xhat = (x - mean) * jax.lax.rsqrt(var + eps)
    o_ref[...] = xhat * g_ref[...] + b_ref[...]


def add_layernorm(x, r, g, b, eps=1e-12, tm=256):
    """x, r: (M, H) f32; g, b: (1, H) f32 -> LayerNorm(x + r), row-tiled and pipelined."""
    M, H = x.shape
    tm = _pick_tile(M, tm)
    grid = (M // tm,)
    return pl.pallas_call(
        functools.partial(_add_layernorm_kernel, eps=eps),
        out_shape=jax.ShapeDtypeStruct((M, H), jnp.float32),
        grid=grid,
        in_specs=[
            pl.BlockSpec((tm, H), lambda i: (i, 0)),
            pl.BlockSpec((tm, H), lambda i: (i, 0)),
            pl.BlockSpec((1, H), lambda i: (0, 0)),
            pl.BlockSpec((1, H), lambda i: (0, 0)),
        ],
        out_specs=pl.BlockSpec((tm, H), lambda i: (i, 0)),
        compiler_params=pltpu.CompilerParams(dimension_semantics=("parallel",)),
    )(x, r, g, b)


def _attention_kernel(q_ref, k_ref, v_ref, mb_ref, o_ref, *, scale):
    """All heads of one batch element: QK^T -> masked softmax -> PV.

    MXU dots in bf16 (f32 accumulation); mask add / softmax in f32; approx
    reciprocal on the EUP slot."""
    q = q_ref[0].astype(jnp.bfloat16)       # (nh, S, Dh)
    k = k_ref[0].astype(jnp.bfloat16)       # (nh, S, Dh)
    v = v_ref[0].astype(jnp.bfloat16)       # (nh, S, Dh)
    bias = mb_ref[0]                        # (1, S) f32 additive mask (-1e9 at pad)

    # Contract on Dh without an explicit k transpose.
    s = jnp.einsum('hqd,hkd->hqk', q, k, preferred_element_type=jnp.float32)
    s = s * scale + bias[None, :, :]        # broadcast over heads and query positions

    m = jnp.max(s, axis=-1, keepdims=True)
    p = jnp.exp(s - m)
    p = p * pl.reciprocal(jnp.sum(p, axis=-1, keepdims=True), approx=True)

    o_ref[0] = jnp.einsum('hqk,hkd->hqd', p.astype(jnp.bfloat16), v,
                          preferred_element_type=jnp.float32)


def multi_head_attention(qh, kh, vh, mask_bias, scale):
    """qh/kh/vh: (B, nh, S, Dh) f32, mask_bias: (B, 1, S) f32 -> (B, nh, S, Dh) f32.

    One grid step per batch element with all heads batched (amortizes grid-step
    overhead and avoids duplicating the mask per head)."""
    B, NH, S, Dh = qh.shape
    return pl.pallas_call(
        functools.partial(_attention_kernel, scale=scale),
        out_shape=jax.ShapeDtypeStruct((B, NH, S, Dh), jnp.float32),
        grid=(B,),
        in_specs=[
            pl.BlockSpec((1, NH, S, Dh), lambda b: (b, 0, 0, 0)),
            pl.BlockSpec((1, NH, S, Dh), lambda b: (b, 0, 0, 0)),
            pl.BlockSpec((1, NH, S, Dh), lambda b: (b, 0, 0, 0)),
            pl.BlockSpec((1, 1, S), lambda b: (b, 0, 0)),
        ],
        out_specs=pl.BlockSpec((1, NH, S, Dh), lambda b: (b, 0, 0, 0)),
        compiler_params=pltpu.CompilerParams(dimension_semantics=("parallel",)),
    )(qh, kh, vh, mask_bias)


# ----------------------------- model (glue) -----------------------------

def init_params(key, vocab, max_pos, hidden, n_layers, n_heads, ffn, num_labels):
    def dense(k, shape, dtype=jnp.bfloat16):
        return (jax.random.normal(k, shape, jnp.float32) * 0.02).astype(dtype)

    # Lane-dense classifier: pad output columns up to a multiple of 128.
    num_labels_padded = max(128, ((num_labels + 127) // 128) * 128)

    keys = jax.random.split(key, 3 + n_layers)
    cls_w = jnp.zeros((hidden, num_labels_padded), jnp.bfloat16)
    cls_w = cls_w.at[:, :num_labels].set(dense(keys[2], (hidden, num_labels)))

    params = {
        "word_emb": dense(keys[0], (vocab, hidden), jnp.float32),
        "pos_emb": dense(keys[1], (max_pos, hidden), jnp.float32),
        "emb_ln_g": jnp.ones((1, hidden), jnp.float32),
        "emb_ln_b": jnp.zeros((1, hidden), jnp.float32),
        "cls_w": cls_w,
        "cls_b": jnp.zeros((1, num_labels_padded), jnp.float32),
        "num_labels": num_labels,
        "layers": [],
        "n_heads": n_heads,
    }
    for li in range(n_layers):
        lk = jax.random.split(keys[3 + li], 6)
        # Fused QKV weight: [wq | wk | wv]  -> (H, 3H), stored bf16 for MXU.
        w_qkv = jnp.concatenate(
            [dense(lk[0], (hidden, hidden)),
             dense(lk[1], (hidden, hidden)),
             dense(lk[2], (hidden, hidden))], axis=1)
        params["layers"].append({
            "w_qkv": w_qkv, "b_qkv": jnp.zeros((1, 3 * hidden), jnp.float32),
            "wo": dense(lk[3], (hidden, hidden)), "bo": jnp.zeros((1, hidden), jnp.float32),
            "ln1_g": jnp.ones((1, hidden), jnp.float32), "ln1_b": jnp.zeros((1, hidden), jnp.float32),
            "w1": dense(lk[4], (hidden, ffn)), "b1": jnp.zeros((1, ffn), jnp.float32),
            "w2": dense(lk[5], (ffn, hidden)), "b2": jnp.zeros((1, hidden), jnp.float32),
            "ln2_g": jnp.ones((1, hidden), jnp.float32), "ln2_b": jnp.zeros((1, hidden), jnp.float32),
        })
    return params


def transformer_layer(p, h, mask_bias_bs, n_heads):
    B, S, H = h.shape
    Dh = H // n_heads
    x2 = h.reshape(B * S, H)

    # Fused Q/K/V projection: single matmul, x2 read from HBM once.
    qkv = linear(x2, p["w_qkv"], p["b_qkv"])            # (B*S, 3H)
    q, k, v = qkv[:, :H], qkv[:, H:2 * H], qkv[:, 2 * H:]

    # TODO(synk): head split/merge transposes are still JAX glue; a per-head
    # column-sliced BlockSpec would remove them but needs Dh >= 128 lane tiles.
    def split_heads(t):
        return t.reshape(B, S, n_heads, Dh).transpose(0, 2, 1, 3)   # (B, nh, S, Dh)

    qh, kh, vh = split_heads(q), split_heads(k), split_heads(v)
    mb = mask_bias_bs[:, None, :]                        # (B, 1, S) — no per-head duplication

    attn = multi_head_attention(qh, kh, vh, mb, scale=1.0 / math.sqrt(Dh))
    attn = attn.transpose(0, 2, 1, 3).reshape(B * S, H)
    attn = linear(attn, p["wo"], p["bo"])

    h2 = add_layernorm(x2, attn, p["ln1_g"], p["ln1_b"])            # sa_layer_norm (fused residual)
    f = linear(h2, p["w1"], p["b1"], activation="gelu")
    f = linear(f, p["w2"], p["b2"])
    h3 = add_layernorm(h2, f, p["ln2_g"], p["ln2_b"])               # output_layer_norm (fused residual)
    return h3.reshape(B, S, H)


def distilbert_token_logits(params, input_ids, attention_mask):
    B, S = input_ids.shape
    H = params["word_emb"].shape[1]
    n_heads = params["n_heads"]
    num_labels = params["num_labels"]

    # Embeddings (gather stays in JAX glue); word+pos add fused into the LN kernel.
    word = jnp.take(params["word_emb"], input_ids, axis=0)                  # (B, S, H)
    pos = jnp.broadcast_to(params["pos_emb"][:S][None, :, :], (B, S, H))    # (B, S, H)
    h = add_layernorm(word.reshape(B * S, H), pos.reshape(B * S, H),
                      params["emb_ln_g"], params["emb_ln_b"]).reshape(B, S, H)

    mask_bias = (1.0 - attention_mask.astype(jnp.float32)) * -1e9          # (B, S)
    for layer_p in params["layers"]:
        h = transformer_layer(layer_p, h, mask_bias, n_heads)

    logits_padded = linear(h.reshape(B * S, H), params["cls_w"], params["cls_b"])
    return logits_padded[:, :num_labels].reshape(B, S, num_labels)


def bert_ner_forward(params, input_ids, attention_mask, labels=None):
    """Mirrors BertNER.forward: returns logits, or (loss, logits) when labels given."""
    logits = distilbert_token_logits(params, input_ids, attention_mask)
    if labels is None:
        return logits
    # HF CrossEntropyLoss over flattened tokens, ignore_index = -100 (plain-JAX glue).
    num_labels = logits.shape[-1]
    flat_logits = logits.reshape(-1, num_labels)
    flat_labels = labels.reshape(-1)
    valid = (flat_labels != -100)
    logp = jax.nn.log_softmax(flat_logits, axis=-1)
    safe_labels = jnp.where(valid, flat_labels, 0)
    nll = -jnp.take_along_axis(logp, safe_labels[:, None], axis=-1)[:, 0]
    loss = jnp.sum(jnp.where(valid, nll, 0.0)) / jnp.maximum(jnp.sum(valid), 1)
    return loss, logits


# ----------------------------- main -----------------------------

if __name__ == "__main__":
    key = jax.random.PRNGKey(0)
    k_param, k_ids, k_labels = jax.random.split(key, 3)

    # Small synthetic DistilBERT-like config.
    B, S = 2, 16
    VOCAB, MAX_POS, HIDDEN, N_LAYERS, N_HEADS, FFN = 100, 64, 64, 2, 2, 128
    NUM_LABELS = 5  # token_dims

    params = init_params(k_param, VOCAB, MAX_POS, HIDDEN, N_LAYERS, N_HEADS, FFN, NUM_LABELS)

    input_ids = jax.random.randint(k_ids, (B, S), 0, VOCAB, dtype=jnp.int32)
    attention_mask = jnp.ones((B, S), dtype=jnp.int32).at[:, S - 4:].set(0)  # some padding
    labels = jax.random.randint(k_labels, (B, S), 0, NUM_LABELS, dtype=jnp.int32)

    # labels=None path (logits only), as in the module's first branch.
    logits_only = bert_ner_forward(params, input_ids, attention_mask, labels=None)
    # labels path ((loss, logits)), as returned by the module.
    loss, logits = bert_ner_forward(params, input_ids, attention_mask, labels=labels)

    jax.block_until_ready((logits_only, loss, logits))
    assert logits.shape == (B, S, NUM_LABELS)
    assert logits_only.shape == (B, S, NUM_LABELS)
    assert bool(jnp.isfinite(loss))
    print("KERNEL_OK")
</pallas_src>

<mosaic_0001>
module attributes {stable_mosaic.version = 11 : i64} {
  func.func @_add_layernorm_kernel(%arg0: i32, %arg1: memref<32x64xf32, #tpu.memory_space<vmem>>, %arg2: memref<32x64xf32, #tpu.memory_space<vmem>>, %arg3: memref<1x64xf32, #tpu.memory_space<vmem>>, %arg4: memref<1x64xf32, #tpu.memory_space<vmem>>, %arg5: memref<32x64xf32, #tpu.memory_space<vmem>>) attributes {dimension_semantics = [#tpu.dimension_semantics<parallel>], iteration_bounds = array<i64: 1>, scalar_prefetch = 0 : i64, scratch_operands = 0 : i64, tpu.core_type = #tpu.core_type<tc>, window_params = [{transform_indices = @transform_0, window_bounds = array<i64: 32, 64>}, {transform_indices = @transform_1, window_bounds = array<i64: 32, 64>}, {pipeline_mode = #tpu.pipeline_mode<synchronous>, transform_indices = @transform_2, window_bounds = array<i64: 1, 64>}, {pipeline_mode = #tpu.pipeline_mode<synchronous>, transform_indices = @transform_3, window_bounds = array<i64: 1, 64>}, {transform_indices = @transform_4, window_bounds = array<i64: 32, 64>}]} {
    %c0 = arith.constant 0 : index
    %c0_0 = arith.constant 0 : index
    %0 = vector.load %arg1[%c0, %c0_0] : memref<32x64xf32, #tpu.memory_space<vmem>>, vector<32x64xf32>
    %c0_1 = arith.constant 0 : index
    %c0_2 = arith.constant 0 : index
    %1 = vector.load %arg2[%c0_1, %c0_2] : memref<32x64xf32, #tpu.memory_space<vmem>>, vector<32x64xf32>
    %2 = arith.addf %0, %1 : vector<32x64xf32>
    %cst = arith.constant dense<0.000000e+00> : vector<32xf32>
    %3 = vector.multi_reduction <add>, %2, %cst [1] : vector<32x64xf32> to vector<32xf32>
    %4 = vector.shape_cast %3 : vector<32xf32> to vector<32x1xf32>
    %cst_3 = arith.constant 6.400000e+01 : f32
    %5 = vector.broadcast %cst_3 : f32 to vector<32x1xf32>
    %6 = arith.divf %4, %5 : vector<32x1xf32>
    %7 = vector.broadcast %6 : vector<32x1xf32> to vector<32x64xf32>
    %8 = arith.subf %2, %7 : vector<32x64xf32>
    %9 = arith.mulf %8, %8 : vector<32x64xf32>
    %cst_4 = arith.constant dense<0.000000e+00> : vector<32xf32>
    %10 = vector.multi_reduction <add>, %9, %cst_4 [1] : vector<32x64xf32> to vector<32xf32>
    %11 = vector.shape_cast %10 : vector<32xf32> to vector<32x1xf32>
    %cst_5 = arith.constant 6.400000e+01 : f32
    %12 = vector.broadcast %cst_5 : f32 to vector<32x1xf32>
    %13 = arith.divf %11, %12 : vector<32x1xf32>
    %14 = vector.broadcast %6 : vector<32x1xf32> to vector<32x64xf32>
    %15 = arith.subf %2, %14 : vector<32x64xf32>
    %cst_6 = arith.constant 9.99999996E-13 : f32
    %16 = vector.broadcast %cst_6 : f32 to vector<32x1xf32>
    %17 = arith.addf %13, %16 : vector<32x1xf32>
    %18 = math.rsqrt %17 : vector<32x1xf32>
    %19 = vector.broadcast %18 : vector<32x1xf32> to vector<32x64xf32>
    %20 = arith.mulf %15, %19 : vector<32x64xf32>
    %c0_7 = arith.constant 0 : index
    %c0_8 = arith.constant 0 : index
    %21 = vector.load %arg3[%c0_7, %c0_8] : memref<1x64xf32, #tpu.memory_space<vmem>>, vector<1x64xf32>
    %22 = vector.broadcast %21 : vector<1x64xf32> to vector<32x64xf32>
    %23 = arith.mulf %20, %22 : vector<32x64xf32>
    %c0_9 = arith.constant 0 : index
    %c0_10 = arith.constant 0 : index
    %24 = vector.load %arg4[%c0_9, %c0_10] : memref<1x64xf32, #tpu.memory_space<vmem>>, vector<1x64xf32>
    %25 = vector.broadcast %24 : vector<1x64xf32> to vector<32x64xf32>
    %26 = arith.addf %23, %25 : vector<32x64xf32>
    %c0_11 = arith.constant 0 : index
    %c0_12 = arith.constant 0 : index
    %27 = vector.load %arg5[%c0_11, %c0_12] : memref<32x64xf32, #tpu.memory_space<vmem>>, vector<32x64xf32>
    tpu.vector_store %arg5[%c0_11, %c0_12], %26 {strides = array<i32>} : memref<32x64xf32, #tpu.memory_space<vmem>>, vector<32x64xf32>,
    return
  }
  func.func @transform_0(%arg0: i32) -> (i32, i32) {
    %c0_i32 = arith.constant 0 : i32
    %c0_i32_0 = arith.constant 0 : i32
    return %arg0, %c0_i32 : i32, i32
  }
  func.func @transform_1(%arg0: i32) -> (i32, i32) {
    %c0_i32 = arith.constant 0 : i32
    %c0_i32_0 = arith.constant 0 : i32
    return %arg0, %c0_i32 : i32, i32
  }
  func.func @transform_2(%arg0: i32) -> (i32, i32) {
    %c0_i32 = arith.constant 0 : i32
    %c0_i32_0 = arith.constant 0 : i32
    %c0_i32_1 = arith.constant 0 : i32
    return %c0_i32, %c0_i32_0 : i32, i32
  }
  func.func @transform_3(%arg0: i32) -> (i32, i32) {
    %c0_i32 = arith.constant 0 : i32
    %c0_i32_0 = arith.constant 0 : i32
    %c0_i32_1 = arith.constant 0 : i32
    return %c0_i32, %c0_i32_0 : i32, i32
  }
  func.func @transform_4(%arg0: i32) -> (i32, i32) {
    %c0_i32 = arith.constant 0 : i32
    %c0_i32_0 = arith.constant 0 : i32
    return %arg0, %c0_i32 : i32, i32
  }
}

</mosaic_0001>

<llo_original>
// kernel: tpu_custom_call.1
$region0: #{tpu_custom_call.1}
  #allocation0 [shape = 'u32[]', space=smem, size = 0x4, offset = 0x4, fixed_abs, tag = 'smem constant byte address 0x4 - core index']
  #allocation1 [shape = 'u32[144,128]{1,0:T(1,128)}', space=vmem, size = 0x12000, scoped, tag = 'internal scratch']
  %s0 = inlined_call_operand.hbm [shape: f32[32,64], index: 0, kind: input, shape index: {}]
  %s1 = inlined_call_operand.hbm [shape: f32[32,64], index: 1, kind: input, shape index: {}]
  %s2 = inlined_call_operand.vmem [shape: f32[1,64], index: 2, kind: input, shape index: {}]
  %s3 = inlined_call_operand.vmem [shape: f32[1,64], index: 3, kind: input, shape index: {}]
  %s4 = inlined_call_operand.hbm [shape: f32[32,64], index: 4, kind: output, shape index: {}]
  %s5 = sld [smem:[#allocation0]]
  $region34: #{tpu_custom_call.1} parent=0
    _
  %s7 = ssub.s32 1, %s5
  %s8 = scalar_select 0, %s7, %s5
  $region1: #{tpu_custom_call.1} parent=0
    #allocation2 [shape = 'u8[16384]{0}', space=vmem, size = 0x4000, scoped, tag = 'input window, operand 0, single buffered']
    #allocation3 [shape = 's32[1]{0}', space=sflag, size = 0x4, scoped, tag = 'scoped memory for tpu_custom_call.1']
    #allocation4 [shape = 's32[1]{0}', space=sflag, size = 0x4, scoped, tag = 'scoped memory for tpu_custom_call.1']
    #allocation5 [shape = 'u8[16384]{0}', space=vmem, size = 0x4000, scoped, tag = 'input window, operand 1, single buffered']
    #allocation6 [shape = 's32[1]{0}', space=sflag, size = 0x4, scoped, tag = 'scoped memory for tpu_custom_call.1']
    #allocation7 [shape = 'u8[16384]{0}', space=vmem, size = 0x4000, scoped, tag = 'output window, operand 0, single buffered']
    %9 = vsyncpa [#allocation3], 0
    %10 = vsyncpa [#allocation6], 0
    %11 = vsyncpa [#allocation4], 0
    // Predicated region
    $region2: #{tpu_custom_call.1} parent=1 // pred_check
      _
    $region3: #{tpu_custom_call.1} parent=1 // pred_check_branch
      %13 = sbr.rel (0) target = $region5
    $region4: #{tpu_custom_call.1} parent=1 // pred_region
      %s15 = ssub.s32 512, 512
      %16 = vsyncadd [#allocation3], %s15
      %s17 = sshll.u32 [#allocation2], 4
      %s18 = int_to_ptr.vmem [resolvable:$true] %s17
      %23 = dma.hbm_to_vmem [thread:$0]  %s0, 512, %s18, [#allocation3], 128, 128, 8
    $region5: #{tpu_custom_call.1} parent=1 // pred_fallthru
      _
    // Predicated region
    $region6: #{tpu_custom_call.1} parent=1 // pred_check
      _
    $region7: #{tpu_custom_call.1} parent=1 // pred_check_branch
      %25 = sbr.rel (0) target = $region9
    $region8: #{tpu_custom_call.1} parent=1 // pred_region
      %s27 = ssub.s32 512, 512
      %28 = vsyncadd [#allocation6], %s27
      %s29 = sshll.u32 [#allocation5], 4
      %s30 = int_to_ptr.vmem [resolvable:$true] %s29
      %35 = dma.hbm_to_vmem [thread:$0]  %s1, 512, %s30, [#allocation6], 128, 128, 8
    $region9: #{tpu_custom_call.1} parent=1 // pred_fallthru
      _
    // Predicated region
    $region10: #{tpu_custom_call.1} parent=1 // pred_check
      _
    $region11: #{tpu_custom_call.1} parent=1 // pred_check_branch
      %37 = sbr.rel (0) target = $region13
    $region12: #{tpu_custom_call.1} parent=1 // pred_region
      _
    $region13: #{tpu_custom_call.1} parent=1 // pred_fallthru
      _
    // Predicated region
    $region14: #{tpu_custom_call.1} parent=1 // pred_check
      _
    $region15: #{tpu_custom_call.1} parent=1 // pred_check_branch
      %39 = sbr.rel (0) target = $region17
    $region16: #{tpu_custom_call.1} parent=1 // pred_region
      _
    $region17: #{tpu_custom_call.1} parent=1 // pred_fallthru
      _
    // Predicated region
    $region18: #{tpu_custom_call.1} parent=1 // pred_check
      _
    $region19: #{tpu_custom_call.1} parent=1 // pred_check_branch
      %41 = sbr.rel (0) target = $region21
    $region20: #{tpu_custom_call.1} parent=1 // pred_region
      %42 = dma.done [#allocation3], 512
    $region21: #{tpu_custom_call.1} parent=1 // pred_fallthru
      _
    // Predicated region
    $region22: #{tpu_custom_call.1} parent=1 // pred_check
      _
    $region23: #{tpu_custom_call.1} parent=1 // pred_check_branch
      %44 = sbr.rel (0) target = $region25
    $region24: #{tpu_custom_call.1} parent=1 // pred_region
      %45 = dma.done [#allocation6], 512
    $region25: #{tpu_custom_call.1} parent=1 // pred_fallthru
      _
    %v46 = vld [vmem:[#allocation2] sm:$0xff]
    %v47 = vld [vmem:[#allocation2 + $0x8] sm:$0xff]
    %v48 = vld [vmem:[#allocation2 + $0x10] sm:$0xff]
    %v49 = vld [vmem:[#allocation2 + $0x18] sm:$0xff]
    %v50 = vld [vmem:[#allocation5] sm:$0xff]
    %v51 = vld [vmem:[#allocation5 + $0x8] sm:$0xff]
    %v52 = vld [vmem:[#allocation5 + $0x10] sm:$0xff]
    %v53 = vld [vmem:[#allocation5 + $0x18] sm:$0xff]
    %v54 = vadd.f32 %v46, %v50
    %v55 = vadd.f32 %v47, %v51
    %v56 = vadd.f32 %v48, %v52
    %v57 = vadd.f32 %v49, %v53
    %vm58 = vcmask 523264
    %v59 = vsel %vm58, %v54, 0.0
    %60 = vadd.xlane.f32.xlu0 %v59
    %v61 = vpop.xlane.xlu0 %60
    %v62 = vsel %vm58, %v55, 0.0
    %63 = vadd.xlane.f32.xlu0 %v62
    %v64 = vpop.xlane.xlu0 %63
    %v65 = vsel %vm58, %v56, 0.0
    %66 = vadd.xlane.f32.xlu0 %v65
    %v67 = vpop.xlane.xlu0 %66
    %v68 = vsel %vm58, %v57, 0.0
    %69 = vadd.xlane.f32.xlu0 %v68
    %v70 = vpop.xlane.xlu0 %69
    %v71 = vrcp.pop 64.0
    %v72 = vmul.f32 %v61, %v71
    %v73 = vmul.f32 %v64, %v71
    %v74 = vmul.f32 %v67, %v71
    %v75 = vmul.f32 %v70, %v71
    %v76 = vsub.f32 %v54, %v72
    %v77 = vsub.f32 %v55, %v73
    %v78 = vsub.f32 %v56, %v74
    %v79 = vsub.f32 %v57, %v75
    %v80 = vmul.f32 %v76, %v76
    %v81 = vmul.f32 %v77, %v77
    %v82 = vmul.f32 %v78, %v78
    %v83 = vmul.f32 %v79, %v79
    %v84 = vsel %vm58, %v80, 0.0
    %85 = vadd.xlane.f32.xlu0 %v84
    %v86 = vpop.xlane.xlu0 %85
    %v87 = vsel %vm58, %v81, 0.0
    %88 = vadd.xlane.f32.xlu0 %v87
    %v89 = vpop.xlane.xlu0 %88
    %v90 = vsel %vm58, %v82, 0.0
    %91 = vadd.xlane.f32.xlu0 %v90
    %v92 = vpop.xlane.xlu0 %91
    %v93 = vsel %vm58, %v83, 0.0
    %94 = vadd.xlane.f32.xlu0 %v93
    %v95 = vpop.xlane.xlu0 %94
    %v96 = vmul.f32 %v86, %v71
    %v97 = vmul.f32 %v89, %v71
    %v98 = vmul.f32 %v92, %v71
    %v99 = vmul.f32 %v95, %v71
    %v100 = vadd.f32 %v96, 1e-12
    %v101 = vadd.f32 %v97, 1e-12
    %v102 = vadd.f32 %v98, 1e-12
    %v103 = vadd.f32 %v99, 1e-12
    %v104 = vrsqrt.pop %v100
    %v105 = vrsqrt.pop %v101
    %v106 = vrsqrt.pop %v102
    %v107 = vrsqrt.pop %v103
    %v108 = vmul.f32 %v76, %v104
    %v109 = vmul.f32 %v77, %v105
    %v110 = vmul.f32 %v78, %v106
    %v111 = vmul.f32 %v79, %v107
    %v112 = vld [vmem:[%s2] sm:$0x1]
    %v114 = vlaneseq
    %v115 = vshrl.u32 %v114, 7
    %v116 = vsub.s32 0, %v115
    %v117 = vrot.slane %v112, %v116
    %v119 = vmul.f32 %v108, %v117
    %v120 = vmul.f32 %v109, %v117
    %v121 = vmul.f32 %v110, %v117
    %v122 = vmul.f32 %v111, %v117
    %v123 = vld [vmem:[%s3] sm:$0x1]
    %v125 = vlaneseq
    %v126 = vshrl.u32 %v125, 7
    %v127 = vsub.s32 0, %v126
    %v128 = vrot.slane %v123, %v127
    %v130 = vadd.f32 %v119, %v128
    %v131 = vadd.f32 %v120, %v128
    %v132 = vadd.f32 %v121, %v128
    %v133 = vadd.f32 %v122, %v128
    %134 = vst.msk [vmem:[#allocation7] sm:$0xff] %vm58, %v130
    %135 = vst.msk [vmem:[#allocation7 + $0x8] sm:$0xff] %vm58, %v131
    %136 = vst.msk [vmem:[#allocation7 + $0x10] sm:$0xff] %vm58, %v132
    %137 = vst.msk [vmem:[#allocation7 + $0x18] sm:$0xff] %vm58, %v133
    // Predicated region
    $region26: #{tpu_custom_call.1} parent=1 // pred_check
      _
    $region27: #{tpu_custom_call.1} parent=1 // pred_check_branch
      %139 = sbr.rel (0) target = $region29
    $region28: #{tpu_custom_call.1} parent=1 // pred_region
      %s141 = ssub.s32 512, 512
      %142 = vsyncadd [#allocation4], %s141
      %s143 = sshll.u32 [#allocation7], 4
      %s144 = int_to_ptr.vmem [resolvable:$true] %s143
      %149 = dma.vmem_to_hbm [thread:$0]  %s144, 512, %s4, [#allocation4], 128, 128, 8
    $region29: #{tpu_custom_call.1} parent=1 // pred_fallthru
      _
    // Predicated region
    $region30: #{tpu_custom_call.1} parent=1 // pred_check
      _
    $region31: #{tpu_custom_call.1} parent=1 // pred_check_branch
      %151 = sbr.rel (0) target = $region33
    $region32: #{tpu_custom_call.1} parent=1 // pred_region
      %152 = dma.done [#allocation4], 512
    $region33: #{tpu_custom_call.1} parent=1 // pred_fallthru
      _
    %153 = vsyncpa [#allocation3], 1
    %154 = vsyncpa [#allocation6], 1
    %155 = vsyncpa [#allocation4], 1

</llo_original>
